<compile_context>
chip_gen: v7x
topology: tpu7x:2x2x1
jax: 0.10.0
libtpu: 0.0.40
codegen_flags: <defaults>
</compile_context>

<pallas_src>
import functools

import jax
import jax.numpy as jnp
import numpy as np
from jax.experimental import pallas as pl
from jax.experimental.pallas import tpu as pltpu


# ----------------------------------------------------------------------------
# target-dependent VMEM limit (v7x: 64 MiB physical -> 32 MiB; v5e/v6e: 64 MiB)
# ----------------------------------------------------------------------------
@functools.lru_cache(maxsize=None)
def _vmem_limit_bytes():
    try:
        cap = int(pltpu.get_tpu_info().vmem_capacity_bytes)
    except Exception:
        cap = 64 << 20
    return int(min(cap // 2, 64 << 20))


# ----------------------------------------------------------------------------
# glue helpers
# ----------------------------------------------------------------------------
def _im2col(x, kh, kw, stride, pad):
    """x: NHWC -> patches (N*OH*OW, KH*KW*C), row-order (kh, kw, c).

    Only used for the 7x7 stem conv (1 input channel -> tiny patch matrix)."""
    n, h, w, c = x.shape
    if pad:
        x = jnp.pad(x, ((0, 0), (pad, pad), (pad, pad), (0, 0)))
    hp, wp = h + 2 * pad, w + 2 * pad
    oh = (hp - kh) // stride + 1
    ow = (wp - kw) // stride + 1
    cols = []
    for i in range(kh):
        for j in range(kw):
            cols.append(
                jax.lax.slice(
                    x,
                    (0, i, j, 0),
                    (n, i + (oh - 1) * stride + 1, j + (ow - 1) * stride + 1, c),
                    (1, stride, stride, 1),
                )
            )
    cols = jnp.concatenate(cols, axis=-1)  # (n, oh, ow, kh*kw*c)
    return cols.reshape(n * oh * ow, kh * kw * c), (n, oh, ow)


def _phases(xp, stride):
    """Decompose a padded NHWC map into stride*stride decimated phases.

    Total bytes written == one copy of the padded map, so tap windows inside
    the kernels are contiguous (no strided VMEM reads needed)."""
    if stride == 1:
        return [xp]
    return [xp[:, a::stride, b::stride, :] for a in range(stride) for b in range(stride)]


# ----------------------------------------------------------------------------
# Pallas kernels
# ----------------------------------------------------------------------------
def _gemm_kernel(x_ref, w_ref, b_ref, o_ref, *, relu):
    """(TM,K)bf16 @ (K,TN)bf16 on the MXU, f32 acc, bias(+ReLU), bf16 store."""
    y = jnp.dot(x_ref[...], w_ref[...], preferred_element_type=jnp.float32)
    y = y + b_ref[...]
    if relu:
        y = jnp.maximum(y, 0.0)
    o_ref[...] = y.astype(o_ref.dtype)


def _conv3x3_kernel(*refs, stride, oh, ow, c, relu, residual):
    """Fused direct 3x3 conv for one image x one oc-tile.

    Inputs: stride*stride phase refs of the padded activation, BN-folded bf16
    weights (9*c, tn), f32 bias (1, tn), optional bf16 residual (1, oh*ow, tn).
    Unrolls the 9 taps, accumulates in f32, fuses bias/residual/ReLU, stores
    bf16."""
    nph = stride * stride
    ph = refs[:nph]
    w_ref, b_ref = refs[nph], refs[nph + 1]
    if residual:
        id_ref, o_ref = refs[nph + 2], refs[nph + 3]
    else:
        o_ref = refs[nph + 2]
    tn = o_ref.shape[-1]
    acc = jnp.zeros((oh * ow, tn), jnp.float32)
    for i in range(3):
        for j in range(3):
            pr = ph[(i % stride) * stride + (j % stride)]
            r0, c0 = i // stride, j // stride
            a = pr[0, r0:r0 + oh, c0:c0 + ow, :].reshape(oh * ow, c)
            wt = w_ref[(3 * i + j) * c:(3 * i + j + 1) * c, :]
            acc = acc + jnp.dot(a, wt, preferred_element_type=jnp.float32)
    y = acc + b_ref[...]
    if residual:
        y = y + id_ref[0].astype(jnp.float32)
    if relu:
        y = jnp.maximum(y, 0.0)
    o_ref[0] = y.astype(o_ref.dtype)


def _maxpool_kernel(p00, p01, p10, p11, o_ref, *, oh, ow):
    """MaxPool(3,2,1) over one image, fed by the 4 phase views (single copy of
    the padded map in HBM instead of 9 tap copies)."""
    phases = ((p00, p01), (p10, p11))
    acc = None
    for i in range(3):
        for j in range(3):
            pr = phases[i % 2][j % 2]
            t = pr[0, i // 2:i // 2 + oh, j // 2:j // 2 + ow, :]
            acc = t if acc is None else jnp.maximum(acc, t)
    o_ref[0] = acc


# ----------------------------------------------------------------------------
# Pallas wrappers
# ----------------------------------------------------------------------------
def gemm_bias_act(x, w, bias, *, relu):
    """y = act(x @ w + bias); x cast to bf16, w bf16 (BN folded), bf16 output."""
    m, k = x.shape
    k2, n = w.shape
    assert k == k2
    x = x.astype(jnp.bfloat16)
    b2 = bias.reshape(1, n).astype(jnp.float32)

    # M tiling: 128-wide tiles so v7x's two cores both get work; pad ragged M.
    m_pad = 0
    if m > 128 and m % 128 != 0:
        m_pad = (-m) % 128
        x = jnp.pad(x, ((0, m_pad), (0, 0)))
    mp = m + m_pad
    tm = 128 if (mp > 128 and mp % 128 == 0) else mp
    tn = 256 if (n > 256 and n % 256 == 0) else (128 if (n > 128 and n % 128 == 0) else n)
    grid = (mp // tm, n // tn)

    out = pl.pallas_call(
        functools.partial(_gemm_kernel, relu=relu),
        out_shape=jax.ShapeDtypeStruct((mp, n), jnp.bfloat16),
        grid=grid,
        in_specs=[
            pl.BlockSpec((tm, k), lambda i, j: (i, 0)),
            pl.BlockSpec((k, tn), lambda i, j: (0, j)),
            pl.BlockSpec((1, tn), lambda i, j: (0, j)),
        ],
        out_specs=pl.BlockSpec((tm, tn), lambda i, j: (i, j)),
        compiler_params=pltpu.CompilerParams(
            dimension_semantics=("parallel", "parallel"),
            vmem_limit_bytes=_vmem_limit_bytes(),
        ),
        cost_estimate=pl.CostEstimate(
            flops=2 * mp * k * n,
            transcendentals=0,
            bytes_accessed=mp * k * 2 + k * n * 2 + n * 4 + mp * n * 2,
        ),
    )(x, w, b2)
    if m_pad:
        out = out[:m]
    return out


def conv3x3_fused(x, p, stride, *, relu, identity=None):
    """Fused 3x3 conv + BN(+residual)(+ReLU); x NHWC bf16 -> NHWC bf16."""
    n, h, w_, c = x.shape
    oc = p["w"].shape[1]
    xp = jnp.pad(x.astype(jnp.bfloat16), ((0, 0), (1, 1), (1, 1), (0, 0)))
    hp, wp = h + 2, w_ + 2
    oh = (hp - 3) // stride + 1
    ow = (wp - 3) // stride + 1
    phases = _phases(xp, stride)

    tn = 256 if (oc > 256 and oc % 256 == 0) else oc
    grid = (n, oc // tn)  # both axes parallel: batch x oc-tiles

    in_specs = [pl.BlockSpec((1,) + tuple(ph.shape[1:]), lambda b, jo: (b, 0, 0, 0))
                for ph in phases]
    in_specs += [
        pl.BlockSpec((9 * c, tn), lambda b, jo: (0, jo)),
        pl.BlockSpec((1, tn), lambda b, jo: (0, jo)),
    ]
    args = list(phases) + [p["w"], p["bias"].reshape(1, oc).astype(jnp.float32)]
    residual = identity is not None
    if residual:
        in_specs.append(pl.BlockSpec((1, oh * ow, tn), lambda b, jo: (b, 0, jo)))
        args.append(identity.astype(jnp.bfloat16))

    flops = 2 * n * oh * ow * 9 * c * oc
    bytes_accessed = (xp.size * 2 + 9 * c * oc * 2 + oc * 4
                      + n * oh * ow * oc * 2 * (2 if residual else 1))
    out = pl.pallas_call(
        functools.partial(_conv3x3_kernel, stride=stride, oh=oh, ow=ow, c=c,
                          relu=relu, residual=residual),
        out_shape=jax.ShapeDtypeStruct((n, oh * ow, oc), jnp.bfloat16),
        grid=grid,
        in_specs=in_specs,
        out_specs=pl.BlockSpec((1, oh * ow, tn), lambda b, jo: (b, 0, jo)),
        compiler_params=pltpu.CompilerParams(
            dimension_semantics=("parallel", "parallel"),
            vmem_limit_bytes=_vmem_limit_bytes(),
        ),
        cost_estimate=pl.CostEstimate(flops=flops, transcendentals=0,
                                      bytes_accessed=bytes_accessed),
    )(*args)
    return out.reshape(n, oh, ow, oc)


def maxpool_3x3_s2_p1(x):
    """MaxPool2d(kernel=3, stride=2, padding=1) on NHWC bf16."""
    n, h, w_, c = x.shape
    xp = jnp.pad(x, ((0, 0), (1, 1), (1, 1), (0, 0)), constant_values=-jnp.inf)
    hp, wp = h + 2, w_ + 2
    oh = (hp - 3) // 2 + 1
    ow = (wp - 3) // 2 + 1
    phases = _phases(xp, 2)
    in_specs = [pl.BlockSpec((1,) + tuple(ph.shape[1:]), lambda b: (b, 0, 0, 0))
                for ph in phases]
    return pl.pallas_call(
        functools.partial(_maxpool_kernel, oh=oh, ow=ow),
        out_shape=jax.ShapeDtypeStruct((n, oh, ow, c), x.dtype),
        grid=(n,),
        in_specs=in_specs,
        out_specs=pl.BlockSpec((1, oh, ow, c), lambda b: (b, 0, 0, 0)),
        compiler_params=pltpu.CompilerParams(
            dimension_semantics=("parallel",),
            vmem_limit_bytes=_vmem_limit_bytes(),
        ),
    )(*phases)


# ----------------------------------------------------------------------------
# ResNet-18 (BasicBlock, expansion=1) forward built from the kernels above
# ----------------------------------------------------------------------------
def conv1_stem(x, p):
    """7x7 stride-2 pad-3 conv + BN + ReLU (1 input channel -> im2col GEMM)."""
    cols, (n, oh, ow) = _im2col(x.astype(jnp.bfloat16), 7, 7, 2, 3)
    kp = p["w"].shape[0]  # K zero-padded to 128 at parameter-build time
    cols = jnp.pad(cols, ((0, 0), (0, kp - cols.shape[1])))
    y = gemm_bias_act(cols, p["w"], p["bias"], relu=True)
    return y.reshape(n, oh, ow, -1)


def conv1x1_down(x, p, stride):
    """1x1 stride-s downsample conv + BN (no ReLU)."""
    n, _, _, c = x.shape
    xd = x[:, ::stride, ::stride, :]
    _, oh, ow, _ = xd.shape
    y = gemm_bias_act(xd.reshape(n * oh * ow, c), p["w"], p["bias"], relu=False)
    return y.reshape(n, oh, ow, -1)


def basic_block(x, p):
    out = conv3x3_fused(x, p["conv1"], p["stride"], relu=True)
    if p["downsample"] is not None:
        identity = conv1x1_down(x, p["downsample"], p["stride"])
    else:
        identity = x
    n, oh, ow, cc = identity.shape
    # residual add + ReLU fused into conv2's epilogue (identity carried in bf16)
    return conv3x3_fused(out, p["conv2"], 1, relu=True,
                         identity=identity.reshape(n, oh * ow, cc))


def resnet18_forward(x_nchw, params):
    # NCHW (PyTorch convention) -> NHWC; cast to bf16 *before* the transpose.
    x = jnp.transpose(x_nchw.astype(jnp.bfloat16), (0, 2, 3, 1))
    x = conv1_stem(x, params["conv1"])
    x = maxpool_3x3_s2_p1(x)
    for name in ("layer1", "layer2", "layer3", "layer4"):
        for blk in params[name]:
            x = basic_block(x, blk)
    # AdaptiveAvgPool2d((1,1)) + flatten + fc: tiny (2x512 @ 512x10) -> plain JAX,
    # a pallas_call launch would be pure overhead here.
    feat = jnp.mean(x.astype(jnp.float32), axis=(1, 2))  # (N, 512)
    fc = params["fc"]
    return feat @ fc["w"] + fc["bias"]  # f32 (N, num_classes)


# ----------------------------------------------------------------------------
# deterministic parameter construction (synthetic, no checkpoint)
# ----------------------------------------------------------------------------
def _make_conv_bn(key, ic, oc, k, pad_k_to=None):
    kw_, kb, kg, kbt, km, kv = jax.random.split(key, 6)
    w = jax.random.normal(kw_, (oc, ic, k, k), jnp.float32) / np.sqrt(ic * k * k)
    conv_b = 0.01 * jax.random.normal(kb, (oc,), jnp.float32)
    gamma = 1.0 + 0.01 * jax.random.normal(kg, (oc,), jnp.float32)
    beta = 0.01 * jax.random.normal(kbt, (oc,), jnp.float32)
    mean = 0.01 * jax.random.normal(km, (oc,), jnp.float32)
    var = 1.0 + 0.01 * jax.random.uniform(kv, (oc,), jnp.float32)
    eps = 1e-5
    scale = gamma / jnp.sqrt(var + eps)
    bias = beta - mean * scale + conv_b * scale
    # (OC, IC, KH, KW) -> (KH, KW, IC, OC) -> (KH*KW*IC, OC): row order (i, j, c)
    # matches both the fused-conv tap slices and the stem im2col; BN scale is
    # folded into the bf16 weights.
    w_mat = jnp.transpose(w, (2, 3, 1, 0)).reshape(k * k * ic, oc) * scale[None, :]
    if pad_k_to is not None and w_mat.shape[0] < pad_k_to:
        w_mat = jnp.pad(w_mat, ((0, pad_k_to - w_mat.shape[0]), (0, 0)))
    return {"w": w_mat.astype(jnp.bfloat16), "bias": bias.astype(jnp.float32)}


def make_resnet18_params(key, num_classes=10):
    keys = iter(jax.random.split(key, 64))
    # conv1: K = 7*7*1 = 49, zero-padded to 128 so the im2col GEMM is lane-dense.
    params = {"conv1": _make_conv_bn(next(keys), 1, 64, 7, pad_k_to=128)}
    inplanes = 64
    cfg = [(64, 2, 1), (128, 2, 2), (256, 2, 2), (512, 2, 2)]
    for li, (planes, nblocks, stride) in enumerate(cfg, start=1):
        blocks = []
        for bi in range(nblocks):
            s = stride if bi == 0 else 1
            blk = {
                "stride": s,
                "conv1": _make_conv_bn(next(keys), inplanes, planes, 3),
                "conv2": _make_conv_bn(next(keys), planes, planes, 3),
                "downsample": None,
            }
            if s != 1 or inplanes != planes:
                blk["downsample"] = _make_conv_bn(next(keys), inplanes, planes, 1)
            blocks.append(blk)
            inplanes = planes
        params[f"layer{li}"] = blocks
    kw_, kb = jax.random.split(next(keys))
    w_fc = jax.random.normal(kw_, (num_classes, 512), jnp.float32) / np.sqrt(512.0)
    b_fc = 0.01 * jax.random.normal(kb, (num_classes,), jnp.float32)
    params["fc"] = {"w": w_fc.T.astype(jnp.float32),  # (512, num_classes)
                    "bias": b_fc.astype(jnp.float32)}
    return params


# ----------------------------------------------------------------------------
if __name__ == "__main__":
    key = jax.random.PRNGKey(0)
    kx, kp = jax.random.split(key)
    # NCHW input, 1 input channel (matches nn.Conv2d(1, 64, 7, 2, 3))
    x = jax.random.normal(kx, (2, 1, 32, 32), jnp.float32)
    params = make_resnet18_params(kp, num_classes=10)
    out = resnet18_forward(x, params)
    out = jax.block_until_ready(out)
    assert out.shape == (2, 10) and out.dtype == jnp.float32
    assert bool(jnp.all(jnp.isfinite(out)))
    print("KERNEL_OK")
</pallas_src>

<mosaic_0001>
module attributes {stable_mosaic.version = 11 : i64} {
  func.func @_gemm_kernel(%arg0: i32, %arg1: i32, %arg2: memref<128x128xbf16, #tpu.memory_space<vmem>>, %arg3: memref<128x64xbf16, #tpu.memory_space<vmem>>, %arg4: memref<1x64xf32, #tpu.memory_space<vmem>>, %arg5: memref<128x64xbf16, #tpu.memory_space<vmem>>) attributes {dimension_semantics = [#tpu.dimension_semantics<parallel>, #tpu.dimension_semantics<parallel>], iteration_bounds = array<i64: 4, 1>, scalar_prefetch = 0 : i64, scratch_operands = 0 : i64, tpu.core_type = #tpu.core_type<tc>, window_params = [{transform_indices = @transform_0, window_bounds = array<i64: 128, 128>}, {transform_indices = @transform_1, window_bounds = array<i64: 128, 64>}, {transform_indices = @transform_2, window_bounds = array<i64: 1, 64>}, {transform_indices = @transform_3, window_bounds = array<i64: 128, 64>}]} {
    %c0 = arith.constant 0 : index
    %c0_0 = arith.constant 0 : index
    %0 = vector.load %arg2[%c0, %c0_0] : memref<128x128xbf16, #tpu.memory_space<vmem>>, vector<128x128xbf16>
    %c0_1 = arith.constant 0 : index
    %c0_2 = arith.constant 0 : index
    %1 = vector.load %arg3[%c0_1, %c0_2] : memref<128x64xbf16, #tpu.memory_space<vmem>>, vector<128x64xbf16>
    %cst = arith.constant dense<0.000000e+00> : vector<128x64xf32>
    %2 = tpu.matmul %0, %1, %cst {dimension_numbers = #tpu.dot_dimension_numbers<[1], [0], [0], [1], [0, 0, 1, 1], [], []>} : vector<128x128xbf16>, vector<128x64xbf16>, vector<128x64xf32> -> vector<128x64xf32>
    %c0_3 = arith.constant 0 : index
    %c0_4 = arith.constant 0 : index
    %3 = vector.load %arg4[%c0_3, %c0_4] : memref<1x64xf32, #tpu.memory_space<vmem>>, vector<1x64xf32>
    %4 = vector.broadcast %3 : vector<1x64xf32> to vector<128x64xf32>
    %5 = arith.addf %2, %4 : vector<128x64xf32>
    %cst_5 = arith.constant 0.000000e+00 : f32
    %6 = vector.broadcast %cst_5 : f32 to vector<128x64xf32>
    %7 = arith.maximumf %5, %6 : vector<128x64xf32>
    %8 = arith.truncf %7 : vector<128x64xf32> to vector<128x64xbf16>
    %c0_6 = arith.constant 0 : index
    %c0_7 = arith.constant 0 : index
    %9 = vector.load %arg5[%c0_6, %c0_7] : memref<128x64xbf16, #tpu.memory_space<vmem>>, vector<128x64xbf16>
    tpu.vector_store %arg5[%c0_6, %c0_7], %8 {strides = array<i32>} : memref<128x64xbf16, #tpu.memory_space<vmem>>, vector<128x64xbf16>,
    return
  }
  func.func @transform_0(%arg0: i32, %arg1: i32) -> (i32, i32) {
    %c0_i32 = arith.constant 0 : i32
    %c0_i32_0 = arith.constant 0 : i32
    return %arg0, %c0_i32 : i32, i32
  }
  func.func @transform_1(%arg0: i32, %arg1: i32) -> (i32, i32) {
    %c0_i32 = arith.constant 0 : i32
    %c0_i32_0 = arith.constant 0 : i32
    return %c0_i32, %arg1 : i32, i32
  }
  func.func @transform_2(%arg0: i32, %arg1: i32) -> (i32, i32) {
    %c0_i32 = arith.constant 0 : i32
    %c0_i32_0 = arith.constant 0 : i32
    return %c0_i32, %arg1 : i32, i32
  }
  func.func @transform_3(%arg0: i32, %arg1: i32) -> (i32, i32) {
    %c0_i32 = arith.constant 0 : i32
    return %arg0, %arg1 : i32, i32
  }
}

</mosaic_0001>

<llo_original>
// kernel: tpu_custom_call.1
$region0: #{tpu_custom_call.1}
  #allocation0 [shape = 'u32[]', space=smem, size = 0x4, offset = 0x4, fixed_abs, tag = 'smem constant byte address 0x4 - core index']
  #allocation1 [shape = 'u32[144,128]{1,0:T(1,128)}', space=vmem, size = 0x12000, scoped, tag = 'internal scratch']
  %s0 = inlined_call_operand.hbm [shape: bf16[512,128], index: 0, kind: input, shape index: {}]
  %s1 = inlined_call_operand.vmem [shape: bf16[128,64], index: 1, kind: input, shape index: {}]
  %s2 = inlined_call_operand.vmem [shape: f32[1,64], index: 2, kind: input, shape index: {}]
  %s3 = inlined_call_operand.vmem [shape: bf16[512,64], index: 3, kind: output, shape index: {}]
  %s4 = sld [smem:[#allocation0]]
  $region49: #{tpu_custom_call.1} parent=0
    _
  %s6 = ssub.s32 1, %s4
  %s7 = scalar_select 0, %s6, %s4
  $region1: #{tpu_custom_call.1} parent=0
    #allocation2 [shape = 'u8[65536]{0}', space=vmem, size = 0x10000, scoped, tag = 'input window, operand 0']
    #allocation3 [shape = 's32[2]{0}', space=sflag, size = 0x8, scoped, tag = 'scoped memory for tpu_custom_call.1']
    %8 = vsyncpa [#allocation3], 0
    %s9 = scalar_lea.sflag [#allocation3], 1
    %10 = vsyncpa %s9, 0
    loop: start=0, step=1, limit=6
    $region2: #{tpu_custom_call.1} parent=1 // loop_pre_header
      _
    $region3: #{tpu_custom_call.1} parent=1 // loop_header
      %s12 = sphi 0, %s16
      %p13 = scmp.ge.s32.totalorder %s12, 6
      %s19 = sphi 0, %s31
      %s20 = sphi 0, %s27
      %s21 = sphi 0, %s19
      %s22 = sphi 0, %s20
      %s23 = sphi 0, %s21
      %s24 = sphi 0, %s22
      %s34 = sphi 0, %s36
      %s37 = sphi 0, %s34
      %s38 = sphi 0, %s37
      %s54 = sphi 0, %s38
      %s60 = sphi 0, %s62
      %s63 = sphi 0, %s60
      %s64 = sphi 0, %s63
      %s80 = sphi 0, %s64
      %s86 = sphi 0, %s88
      %s89 = sphi 0, %s86
      %s90 = sphi 0, %s89
      %s106 = sphi 0, %s90
      %s114 = sphi 0, %s116
      %s117 = sphi 0, %s114
      %s118 = sphi 0, %s117
      %s134 = sphi 0, %s118
    $region4: #{tpu_custom_call.1} parent=1 // loop_header_branch
      %15 = sbr.rel (%p13) target = $region8
    $region5: #{tpu_custom_call.1} parent=1 // loop_body
      %s17 = ssub.s32 %s12, 1
      %s18 = ssub.s32 %s12, 2
      %s25 = sadd.s32 1, %s20
      %p26 = scmp.ge.s32.totalorder %s25, 1
      %s27 = scalar_select %p26, 0, %s25
      %s28 = sadd.s32 1, %s19
      %s29 = scalar_select %p26, %s28, %s19
      %p30 = scmp.ge.s32.totalorder %s29, 4
      %s31 = scalar_select %p30, 0, %s29
      %s32 = ssub.s32 %s19, %s31
      %p33 = scmp.eq.s32.totalorder %s32, 0
      %s35 = sadd.s32 %s34, 1
      %s36 = scalar_select %p33, %s34, %s35
      %p39 = pneg %p33
      %p40 = scmp.eq.s32.totalorder %s12, 3
      %p41 = por %p39, %p40
      %p42 = scmp.ne.s32.totalorder %s34, %s37
      %p43 = scmp.eq.s32.totalorder %s12, 0
      %p44 = por %p42, %p43
      %p45 = scmp.ne.s32.totalorder %s34, %s37
      %p46 = scmp.eq.s32.totalorder %s17, 3
      %p47 = por %p45, %p46
      %p48 = scmp.ne.s32.totalorder %s37, %s38
      %p49 = scmp.eq.s32.totalorder %s17, 0
      %p50 = por %p48, %p49
      %p51 = scmp.ne.s32.totalorder %s37, %s38
      %p52 = scmp.eq.s32.totalorder %s18, 3
      %p53 = por %p51, %p52
      %p55 = scmp.ne.s32.totalorder %s38, %s54
      %p56 = scmp.eq.s32.totalorder %s18, 0
      %p57 = por %p55, %p56
      %s58 = ssub.s32 %s20, %s27
      %p59 = scmp.eq.s32.totalorder %s58, 0
      %s61 = sadd.s32 %s60, 1
      %s62 = scalar_select %p59, %s60, %s61
      %p65 = pneg %p59
      %p66 = scmp.eq.s32.totalorder %s12, 3
      %p67 = por %p65, %p66
      %p68 = scmp.ne.s32.totalorder %s60, %s63
      %p69 = scmp.eq.s32.totalorder %s12, 0
      %p70 = por %p68, %p69
      %p71 = scmp.ne.s32.totalorder %s60, %s63
      %p72 = scmp.eq.s32.totalorder %s17, 3
      %p73 = por %p71, %p72
      %p74 = scmp.ne.s32.totalorder %s63, %s64
      %p75 = scmp.eq.s32.totalorder %s17, 0
      %p76 = por %p74, %p75
      %p77 = scmp.ne.s32.totalorder %s63, %s64
      %p78 = scmp.eq.s32.totalorder %s18, 3
      %p79 = por %p77, %p78
      %p81 = scmp.ne.s32.totalorder %s64, %s80
      %p82 = scmp.eq.s32.totalorder %s18, 0
      %p83 = por %p81, %p82
      %s84 = ssub.s32 %s20, %s27
      %p85 = scmp.eq.s32.totalorder %s84, 0
      %s87 = sadd.s32 %s86, 1
      %s88 = scalar_select %p85, %s86, %s87
      %p91 = pneg %p85
      %p92 = scmp.eq.s32.totalorder %s12, 3
      %p93 = por %p91, %p92
      %p94 = scmp.ne.s32.totalorder %s86, %s89
      %p95 = scmp.eq.s32.totalorder %s12, 0
      %p96 = por %p94, %p95
      %p97 = scmp.ne.s32.totalorder %s86, %s89
      %p98 = scmp.eq.s32.totalorder %s17, 3
      %p99 = por %p97, %p98
      %p100 = scmp.ne.s32.totalorder %s89, %s90
      %p101 = scmp.eq.s32.totalorder %s17, 0
      %p102 = por %p100, %p101
      %p103 = scmp.ne.s32.totalorder %s89, %s90
      %p104 = scmp.eq.s32.totalorder %s18, 3
      %p105 = por %p103, %p104
      %p107 = scmp.ne.s32.totalorder %s90, %s106
      %p108 = scmp.eq.s32.totalorder %s18, 0
      %p109 = por %p107, %p108
      %s110 = ssub.s32 %s19, %s31
      %s111 = ssub.s32 %s20, %s27
      %s112 = sor.u32 %s110, %s111
      %p113 = scmp.eq.s32.totalorder %s112, 0
      %s115 = sadd.s32 %s114, 1
      %s116 = scalar_select %p113, %s114, %s115
      %p119 = pneg %p113
      %p120 = scmp.eq.s32.totalorder %s12, 3
      %p121 = por %p119, %p120
      %p122 = scmp.ne.s32.totalorder %s114, %s117
      %p123 = scmp.eq.s32.totalorder %s12, 0
      %p124 = por %p122, %p123
      %p125 = scmp.ne.s32.totalorder %s114, %s117
      %p126 = scmp.eq.s32.totalorder %s17, 3
      %p127 = por %p125, %p126
      %p128 = scmp.ne.s32.totalorder %s117, %s118
      %p129 = scmp.eq.s32.totalorder %s17, 0
      %p130 = por %p128, %p129
      %p131 = scmp.ne.s32.totalorder %s117, %s118
      %p132 = scmp.eq.s32.totalorder %s18, 3
      %p133 = por %p131, %p132
      %p135 = scmp.ne.s32.totalorder %s118, %s134
      %p136 = scmp.eq.s32.totalorder %s18, 0
      %p137 = por %p135, %p136
      %p138 = scmp.le.s32.totalorder 1, %s12
      %p139 = scmp.lt.s32.totalorder %s12, 5
      %p140 = pnand %p138, %p139
      %p141 = pneg %p140
      // Predicated region
      $region9: #{tpu_custom_call.1} parent=5 // pred_check
        _
      $region10: #{tpu_custom_call.1} parent=5 // pred_check_branch
        %143 = sbr.rel (%p140) target = $region12
      $region11: #{tpu_custom_call.1} parent=5 // pred_region
        %s144 = ssub.s32 %s12, 1
        // Predicated region
        $region13: #{tpu_custom_call.1} parent=11 // pred_check
          %p145 = pneg %p76
        $region14: #{tpu_custom_call.1} parent=11 // pred_check_branch
          %147 = sbr.rel (%p145) target = $region16
        $region15: #{tpu_custom_call.1} parent=11 // pred_region
          %p148 = scmp.lt.s32.totalorder %s22, 0
          %s149 = scalar_select %p148, %s22, 0
          %s150 = smul.addr %s149, 4
          %s151 = scalar_lea.vmem %s1, %s150
        $region16: #{tpu_custom_call.1} parent=11 // pred_fallthru
          _
        // Predicated region
        $region17: #{tpu_custom_call.1} parent=11 // pred_check
          %p152 = pneg %p102
        $region18: #{tpu_custom_call.1} parent=11 // pred_check_branch
          %154 = sbr.rel (%p152) target = $region20
        $region19: #{tpu_custom_call.1} parent=11 // pred_region
          %p155 = scmp.lt.s32.totalorder %s22, 0
          %s156 = scalar_select %p155, %s22, 0
          %s157 = scalar_lea.vmem %s2, %s156
        $region20: #{tpu_custom_call.1} parent=11 // pred_fallthru
          _
      $region12: #{tpu_custom_call.1} parent=5 // pred_fallthru
        _
      %p158 = scmp.lt.s32.totalorder %s12, 4
      // Predicated region
      $region21: #{tpu_custom_call.1} parent=5 // pred_check
        %p159 = pneg %p158
      $region22: #{tpu_custom_call.1} parent=5 // pred_check_branch
        %161 = sbr.rel (%p159) target = $region24
      $region23: #{tpu_custom_call.1} parent=5 // pred_region
        // Predicated region
        $region25: #{tpu_custom_call.1} parent=23 // pred_check
          %p162 = pneg %p44
        $region26: #{tpu_custom_call.1} parent=23 // pred_check_branch
          %164 = sbr.rel (%p162) target = $region28
        $region27: #{tpu_custom_call.1} parent=23 // pred_region
          %s165 = sand.u32 %s34, 1
          %s166 = scalar_lea.sflag [#allocation3], %s165
          %s167 = sand.u32 %s34, 1
          %s168 = smul.addr %s167, 64
          %s169 = scalar_lea.vmem [#allocation2], %s168
          %s170 = smul.u32 16, %s19
          %s172 = ssub.s32 1024, 1024
          %173 = vsyncadd %s166, %s172
          %s174 = smul.addr %s170, 64
          %s175 = scalar_lea.hbm %s0, %s174
          %s176 = sshll.u32 %s169, 4
          %s177 = int_to_ptr.vmem [resolvable:$true] %s176
          %182 = dma.hbm_to_vmem [thread:$0]  %s175, 1024, %s177, %s166, 64, 64, 4
        $region28: #{tpu_custom_call.1} parent=23 // pred_fallthru
          _
      $region24: #{tpu_custom_call.1} parent=5 // pred_fallthru
        _
      %p183 = scmp.le.s32.totalorder 1, %s12
      %p184 = scmp.lt.s32.totalorder %s12, 5
      %p185 = pnand %p183, %p184
      %p186 = pneg %p185
      // Predicated region
      $region29: #{tpu_custom_call.1} parent=5 // pred_check
        _
      $region30: #{tpu_custom_call.1} parent=5 // pred_check_branch
        %188 = sbr.rel (%p185) target = $region32
      $region31: #{tpu_custom_call.1} parent=5 // pred_region
        %s189 = ssub.s32 %s12, 1
        %s190 = sand.u32 %s37, 1
        %s191 = scalar_lea.sflag [#allocation3], %s190
        %s192 = sand.u32 %s37, 1
        %s193 = smul.addr %s192, 64
        %s194 = scalar_lea.vmem [#allocation2], %s193
        // Predicated region
        $region33: #{tpu_custom_call.1} parent=31 // pred_check
          %p195 = pneg %p50
        $region34: #{tpu_custom_call.1} parent=31 // pred_check_branch
          %197 = sbr.rel (%p195) target = $region36
        $region35: #{tpu_custom_call.1} parent=31 // pred_region
          %198 = dma.done %s191, 1024
        $region36: #{tpu_custom_call.1} parent=31 // pred_fallthru
          _
        %s199 = sand.u32 %s37, 1
        %s200 = scalar_lea.sflag [#allocation3], %s199
        %s201 = sand.u32 %s37, 1
        %s202 = smul.addr %s201, 64
        %s203 = scalar_lea.vmem [#allocation2], %s202
        %p204 = pneg %p50
        %p205 = pneg %p47
        %p206 = scmp.lt.s32.totalorder %s22, 0
        %s207 = scalar_select %p206, %s22, 0
        %s208 = smul.addr %s207, 4
        %s209 = scalar_lea.vmem %s1, %s208
        %p210 = pneg %p76
        %p211 = pneg %p73
        %p212 = scmp.lt.s32.totalorder %s22, 0
        %s213 = scalar_select %p212, %s22, 0
        %s214 = scalar_lea.vmem %s2, %s213
        %p215 = pneg %p102
        %p216 = pneg %p99
        %p217 = pneg %p130
        %p218 = pneg %p127
        %s219 = smul.u32 16, %s21
        %p220 = scmp.lt.s32.totalorder %s219, 63
        %s221 = scalar_select %p220, %s219, 63
        %p222 = scmp.lt.s32.totalorder %s22, 0
        %s223 = scalar_select %p222, %s22, 0
        %s224 = sadd.s32 %s223, %s221
        %s225 = smul.addr %s224, 4
        %s226 = scalar_lea.vmem %s3, %s225
        %s227 = smul.u32 16, %s21
        %p228 = scmp.lt.s32.totalorder %s22, 0
        %s229 = scalar_select %p228, %s22, 0
        %s230 = smul.addr %s229, 4
        %s231 = scalar_lea.vmem %s1, %s230
        %p232 = scmp.lt.s32.totalorder %s22, 0
        %s233 = scalar_select %p232, %s22, 0
        %s234 = scalar_lea.vmem %s2, %s233
        %s235 = smul.u32 16, %s21
        %p236 = scmp.lt.s32.totalorder %s235, 63
        %s237 = scalar_select %p236, %s235, 63
        %p238 = scmp.lt.s32.totalorder %s22, 0
        %s239 = scalar_select %p238, %s22, 0
        %s240 = sadd.s32 %s239, %s237
        %s241 = smul.addr %s240, 4
        %s242 = scalar_lea.vmem %s3, %s241
        %s243 = smul.u32 16, %s21
        %v245 = vld [vmem:[%s194] sm:$0xf]
        %v246 = vld [vmem:[%s194 + $0x4] sm:$0xf]
        %v247 = vld [vmem:[%s194 + $0x8] sm:$0xf]
        %v248 = vld [vmem:[%s194 + $0xc] sm:$0xf]
        %v249 = vld [vmem:[%s194 + $0x10] sm:$0xf]
        %v250 = vld [vmem:[%s194 + $0x14] sm:$0xf]
        %v251 = vld [vmem:[%s194 + $0x18] sm:$0xf]
        %v252 = vld [vmem:[%s194 + $0x1c] sm:$0xf]
        %v253 = vld [vmem:[%s194 + $0x20] sm:$0xf]
        %v254 = vld [vmem:[%s194 + $0x24] sm:$0xf]
        %v255 = vld [vmem:[%s194 + $0x28] sm:$0xf]
        %v256 = vld [vmem:[%s194 + $0x2c] sm:$0xf]
        %v257 = vld [vmem:[%s194 + $0x30] sm:$0xf]
        %v258 = vld [vmem:[%s194 + $0x34] sm:$0xf]
        %v259 = vld [vmem:[%s194 + $0x38] sm:$0xf]
        %v260 = vld [vmem:[%s194 + $0x3c] sm:$0xf]
        %v261 = vld [vmem:[%s231] sm:$0xf]
        %v262 = vld [vmem:[%s231 + $0x4] sm:$0xf]
        %v263 = vld [vmem:[%s231 + $0x8] sm:$0xf]
        %v264 = vld [vmem:[%s231 + $0xc] sm:$0xf]
        %v265 = vld [vmem:[%s231 + $0x10] sm:$0xf]
        %v266 = vld [vmem:[%s231 + $0x14] sm:$0xf]
        %v267 = vld [vmem:[%s231 + $0x18] sm:$0xf]
        %v268 = vld [vmem:[%s231 + $0x1c] sm:$0xf]
        %v269 = vld [vmem:[%s231 + $0x20] sm:$0xf]
        %v270 = vld [vmem:[%s231 + $0x24] sm:$0xf]
        %v271 = vld [vmem:[%s231 + $0x28] sm:$0xf]
        %v272 = vld [vmem:[%s231 + $0x2c] sm:$0xf]
        %v273 = vld [vmem:[%s231 + $0x30] sm:$0xf]
        %v274 = vld [vmem:[%s231 + $0x34] sm:$0xf]
        %v275 = vld [vmem:[%s231 + $0x38] sm:$0xf]
        %v276 = vld [vmem:[%s231 + $0x3c] sm:$0xf]
        %v277 = vld [vmem:[%s234] sm:$0x1]
        %v279 = vlaneseq
        %v280 = vshrl.u32 %v279, 7
        %v281 = vsub.s32 0, %v280
        %v282 = vrot.slane %v277, %v281
        %v300 = vunpack.c.l.b16 %v245
        %v301 = vunpack.c.l.b16 %v246
        %v302 = vunpack.c.l.b16 %v247
        %v303 = vunpack.c.l.b16 %v248
        %v304 = vunpack.c.l.b16 %v249
        %v305 = vunpack.c.l.b16 %v250
        %v306 = vunpack.c.l.b16 %v251
        %v307 = vunpack.c.l.b16 %v252
        %v308 = vunpack.c.l.b16 %v253
        %v309 = vunpack.c.l.b16 %v254
        %v310 = vunpack.c.l.b16 %v255
        %v311 = vunpack.c.l.b16 %v256
        %v312 = vunpack.c.l.b16 %v257
        %v313 = vunpack.c.l.b16 %v258
        %v314 = vunpack.c.l.b16 %v259
        %v315 = vunpack.c.l.b16 %v260
        %v316 = vpack.c.b16 %v301, %v300
        %v317 = vpack.c.b16 %v303, %v302
        %v318 = vpack.c.b16 %v305, %v304
        %v319 = vpack.c.b16 %v307, %v306
        %v320 = vpack.c.b16 %v309, %v308
        %v321 = vpack.c.b16 %v311, %v310
        %v322 = vpack.c.b16 %v313, %v312
        %v323 = vpack.c.b16 %v315, %v314
        %v348 = vunpack.c.l.b16 %v261
        %v349 = vunpack.c.l.b16 %v262
        %v350 = vunpack.c.l.b16 %v263
        %v351 = vunpack.c.l.b16 %v264
        %v352 = vunpack.c.l.b16 %v265
        %v353 = vunpack.c.l.b16 %v266
        %v354 = vunpack.c.l.b16 %v267
        %v355 = vunpack.c.l.b16 %v268
        %v356 = vunpack.c.l.b16 %v269
        %v357 = vunpack.c.l.b16 %v270
        %v358 = vunpack.c.l.b16 %v271
        %v359 = vunpack.c.l.b16 %v272
        %v360 = vunpack.c.l.b16 %v273
        %v361 = vunpack.c.l.b16 %v274
        %v362 = vunpack.c.l.b16 %v275
        %v363 = vunpack.c.l.b16 %v276
        %v364 = vpack.c.b16 %v349, %v348
        %v365 = vpack.c.b16 %v351, %v350
        %v366 = vpack.c.b16 %v353, %v352
        %v367 = vpack.c.b16 %v355, %v354
        %v368 = vpack.c.b16 %v357, %v356
        %v369 = vpack.c.b16 %v359, %v358
        %v370 = vpack.c.b16 %v361, %v360
        %v371 = vpack.c.b16 %v363, %v362
        %380 = vmatprep.subr.bf16.mxu0 0
        %381 = vmatpush1.bf16.msra.mxu0 %v364
        %382 = vmatprep.subr.bf16.mxu0 0
        %383 = vmatpush1.bf16.msra.mxu0 %v365
        %384 = vmatprep.subr.bf16.mxu0 0
        %385 = vmatpush1.bf16.msra.mxu0 %v366
        %386 = vmatprep.subr.bf16.mxu0 0
        %387 = vmatpush1.bf16.msra.mxu0 %v367
        %388 = vmatprep.subr.bf16.mxu0 0
        %389 = vmatpush1.bf16.msra.mxu0 %v368
        %390 = vmatprep.subr.bf16.mxu0 0
        %391 = vmatpush1.bf16.msra.mxu0 %v369
        %392 = vmatprep.subr.bf16.mxu0 0
        %393 = vmatpush1.bf16.msra.mxu0 %v370
        %394 = vmatprep.subr.bf16.mxu0 0
        %395 = vmatpush1.bf16.msra.mxu0 %v371
        %396 = vmatprep.subr.bf16.mxu0 0
        %397 = vmatpush1.bf16.msra.mxu0 0
        %398 = vmatprep.subr.bf16.mxu0 0
        %399 = vmatpush1.bf16.msra.mxu0 0
        %400 = vmatprep.subr.bf16.mxu0 0
        %401 = vmatpush1.bf16.msra.mxu0 0
        %402 = vmatprep.subr.bf16.mxu0 0
        %403 = vmatpush1.bf16.msra.mxu0 0
        %404 = vmatprep.subr.bf16.mxu0 0
        %405 = vmatpush1.bf16.msra.mxu0 0
        %406 = vmatprep.subr.bf16.mxu0 0
        %407 = vmatpush1.bf16.msra.mxu0 0
        %408 = vmatprep.subr.bf16.mxu0 0
        %409 = vmatpush1.bf16.msra.mxu0 0
        %410 = vmatprep.subr.bf16.mxu0 0
        %411 = vmatpush1.bf16.msra.mxu0 0
        %412 = vmatprep.mubr.bf16.mxu0 0
        %413 = vmatmul.mubr.bf16.gmra.mrb[0].mxu0 %v316
        %v414 = vpop.f32.mrb[0].mxu0
        %v415 = vadd.f32 %v282, %v414
        %v416 = vpop.f32.mrb[0].mxu0
        %v417 = vpop.f32.mrb[0].mxu0
        %v418 = vadd.f32 %v282, %v417
        %v419 = vpop.f32.mrb[0].mxu0
        %420 = vmatprep.mubr.bf16.mxu0 0
        %421 = vmatmul.mubr.bf16.gmra.mrb[0].mxu0 %v317
        %v422 = vpop.f32.mrb[0].mxu0
        %v423 = vadd.f32 %v282, %v422
        %v424 = vpop.f32.mrb[0].mxu0
        %v425 = vpop.f32.mrb[0].mxu0
        %v426 = vadd.f32 %v282, %v425
        %v427 = vpop.f32.mrb[0].mxu0
        %428 = vmatprep.mubr.bf16.mxu0 0
        %429 = vmatmul.mubr.bf16.gmra.mrb[0].mxu0 %v318
        %v430 = vpop.f32.mrb[0].mxu0
        %v431 = vadd.f32 %v282, %v430
        %v432 = vpop.f32.mrb[0].mxu0
        %v433 = vpop.f32.mrb[0].mxu0
        %v434 = vadd.f32 %v282, %v433
        %v435 = vpop.f32.mrb[0].mxu0
        %436 = vmatprep.mubr.bf16.mxu0 0
        %437 = vmatmul.mubr.bf16.gmra.mrb[0].mxu0 %v319
        %v438 = vpop.f32.mrb[0].mxu0
        %v439 = vadd.f32 %v282, %v438
        %v440 = vpop.f32.mrb[0].mxu0
        %v441 = vpop.f32.mrb[0].mxu0
        %v442 = vadd.f32 %v282, %v441
        %v443 = vpop.f32.mrb[0].mxu0
        %444 = vmatprep.mubr.bf16.mxu0 0
        %445 = vmatmul.mubr.bf16.gmra.mrb[0].mxu0 %v320
        %v446 = vpop.f32.mrb[0].mxu0
        %v447 = vadd.f32 %v282, %v446
        %v448 = vpop.f32.mrb[0].mxu0
        %v449 = vpop.f32.mrb[0].mxu0
        %v450 = vadd.f32 %v282, %v449
        %v451 = vpop.f32.mrb[0].mxu0
        %452 = vmatprep.mubr.bf16.mxu0 0
        %453 = vmatmul.mubr.bf16.gmra.mrb[0].mxu0 %v321
        %v454 = vpop.f32.mrb[0].mxu0
        %v455 = vadd.f32 %v282, %v454
        %v456 = vpop.f32.mrb[0].mxu0
        %v457 = vpop.f32.mrb[0].mxu0
        %v458 = vadd.f32 %v282, %v457
        %v459 = vpop.f32.mrb[0].mxu0
        %460 = vmatprep.mubr.bf16.mxu0 0
        %461 = vmatmul.mubr.bf16.gmra.mrb[0].mxu0 %v322
        %v462 = vpop.f32.mrb[0].mxu0
        %v463 = vadd.f32 %v282, %v462
        %v464 = vpop.f32.mrb[0].mxu0
        %v465 = vpop.f32.mrb[0].mxu0
        %v466 = vadd.f32 %v282, %v465
        %v467 = vpop.f32.mrb[0].mxu0
        %468 = vmatprep.mubr.bf16.mxu0 0
        %469 = vmatmul.mubr.bf16.gmra.mrb[0].mxu0 %v323
        %v470 = vpop.f32.mrb[0].mxu0
        %v471 = vadd.f32 %v282, %v470
        %v472 = vpop.f32.mrb[0].mxu0
        %v473 = vpop.f32.mrb[0].mxu0
        %v474 = vadd.f32 %v282, %v473
        %v475 = vpop.f32.mrb[0].mxu0
        %476 = vdwg.mxu0
        %v477 = vmax.f32 %v415, 0.0
        %v478 = vmax.f32 %v418, 0.0
        %v479 = vmax.f32 %v423, 0.0
        %v480 = vmax.f32 %v426, 0.0
        %v481 = vmax.f32 %v431, 0.0
        %v482 = vmax.f32 %v434, 0.0
        %v483 = vmax.f32 %v439, 0.0
        %v484 = vmax.f32 %v442, 0.0
        %v485 = vmax.f32 %v447, 0.0
        %v486 = vmax.f32 %v450, 0.0
        %v487 = vmax.f32 %v455, 0.0
        %v488 = vmax.f32 %v458, 0.0
        %v489 = vmax.f32 %v463, 0.0
        %v490 = vmax.f32 %v466, 0.0
        %v491 = vmax.f32 %v471, 0.0
        %v492 = vmax.f32 %v474, 0.0
        %v493 = vpack.c.bf16 %v478, %v477
        %v494 = vpack.c.bf16 %v480, %v479
        %v495 = vpack.c.bf16 %v482, %v481
        %v496 = vpack.c.bf16 %v484, %v483
        %v497 = vpack.c.bf16 %v486, %v485
        %v498 = vpack.c.bf16 %v488, %v487
        %v499 = vpack.c.bf16 %v490, %v489
        %v500 = vpack.c.bf16 %v492, %v491
        %v509 = vunpack.c.l.b16 %v493
        %v510 = vunpack.c.h.b16 %v493
        %v511 = vunpack.c.l.b16 %v494
        %v512 = vunpack.c.h.b16 %v494
        %v513 = vunpack.c.l.b16 %v495
        %v514 = vunpack.c.h.b16 %v495
        %v515 = vunpack.c.l.b16 %v496
        %v516 = vunpack.c.h.b16 %v496
        %v517 = vunpack.c.l.b16 %v497
        %v518 = vunpack.c.h.b16 %v497
        %v519 = vunpack.c.l.b16 %v498
        %v520 = vunpack.c.h.b16 %v498
        %v521 = vunpack.c.l.b16 %v499
        %v522 = vunpack.c.h.b16 %v499
        %v523 = vunpack.c.l.b16 %v500
        %v524 = vunpack.c.h.b16 %v500
        %v525 = vpack.c.b16 %v509, %v509
        %v526 = vpack.c.b16 %v510, %v510
        %v527 = vpack.c.b16 %v511, %v511
        %v528 = vpack.c.b16 %v512, %v512
        %v529 = vpack.c.b16 %v513, %v513
        %v530 = vpack.c.b16 %v514, %v514
        %v531 = vpack.c.b16 %v515, %v515
        %v532 = vpack.c.b16 %v516, %v516
        %v533 = vpack.c.b16 %v517, %v517
        %v534 = vpack.c.b16 %v518, %v518
        %v535 = vpack.c.b16 %v519, %v519
        %v536 = vpack.c.b16 %v520, %v520
        %v537 = vpack.c.b16 %v521, %v521
        %v538 = vpack.c.b16 %v522, %v522
        %v539 = vpack.c.b16 %v523, %v523
        %v540 = vpack.c.b16 %v524, %v524
        %vm557 = vcmask 519168
        %558 = vst.msk [vmem:[%s242] sm:$0xf] %vm557, %v525
        %559 = vst.msk [vmem:[%s242 + $0x4] sm:$0xf] %vm557, %v526
        %560 = vst.msk [vmem:[%s242 + $0x8] sm:$0xf] %vm557, %v527
        %561 = vst.msk [vmem:[%s242 + $0xc] sm:$0xf] %vm557, %v528
        %562 = vst.msk [vmem:[%s242 + $0x10] sm:$0xf] %vm557, %v529
        %563 = vst.msk [vmem:[%s242 + $0x14] sm:$0xf] %vm557, %v530
        %564 = vst.msk [vmem:[%s242 + $0x18] sm:$0xf] %vm557, %v531
        %565 = vst.msk [vmem:[%s242 + $0x1c] sm:$0xf] %vm557, %v532
        %566 = vst.msk [vmem:[%s242 + $0x20] sm:$0xf] %vm557, %v533
        %567 = vst.msk [vmem:[%s242 + $0x24] sm:$0xf] %vm557, %v534
        %568 = vst.msk [vmem:[%s242 + $0x28] sm:$0xf] %vm557, %v535
        %569 = vst.msk [vmem:[%s242 + $0x2c] sm:$0xf] %vm557, %v536
        %570 = vst.msk [vmem:[%s242 + $0x30] sm:$0xf] %vm557, %v537
        %571 = vst.msk [vmem:[%s242 + $0x34] sm:$0xf] %vm557, %v538
        %572 = vst.msk [vmem:[%s242 + $0x38] sm:$0xf] %vm557, %v539
        %573 = vst.msk [vmem:[%s242 + $0x3c] sm:$0xf] %vm557, %v540
        %s574 = smul.u32 16, %s21
        %p575 = scmp.lt.s32.totalorder %s574, 63
        %s576 = scalar_select %p575, %s574, 63
        %p577 = scmp.lt.s32.totalorder %s22, 0
        %s578 = scalar_select %p577, %s22, 0
        %s579 = sadd.s32 %s578, %s576
        %s580 = smul.addr %s579, 4
        %s581 = scalar_lea.vmem %s3, %s580
        // Predicated region
        $region37: #{tpu_custom_call.1} parent=31 // pred_check
          %p582 = pneg %p127
        $region38: #{tpu_custom_call.1} parent=31 // pred_check_branch
          %584 = sbr.rel (%p582) target = $region40
        $region39: #{tpu_custom_call.1} parent=31 // pred_region
          %s585 = smul.u32 16, %s21
        $region40: #{tpu_custom_call.1} parent=31 // pred_fallthru
          _
      $region32: #{tpu_custom_call.1} parent=5 // pred_fallthru
        _
      %p586 = scmp.le.s32.totalorder 2, %s12
      // Predicated region
      $region41: #{tpu_custom_call.1} parent=5 // pred_check
        %p587 = pneg %p586
      $region42: #{tpu_custom_call.1} parent=5 // pred_check_branch
        %589 = sbr.rel (%p587) target = $region44
      $region43: #{tpu_custom_call.1} parent=5 // pred_region
        %s590 = ssub.s32 %s12, 2
        // Predicated region
        $region45: #{tpu_custom_call.1} parent=43 // pred_check
          %p591 = pneg %p133
        $region46: #{tpu_custom_call.1} parent=43 // pred_check_branch
          %593 = sbr.rel (%p591) target = $region48
        $region47: #{tpu_custom_call.1} parent=43 // pred_region
          %s594 = smul.u32 16, %s23
          %p595 = scmp.lt.s32.totalorder %s594, 63
          %s596 = scalar_select %p595, %s594, 63
          %p597 = scmp.lt.s32.totalorder %s24, 0
          %s598 = scalar_select %p597, %s24, 0
          %s599 = sadd.s32 %s598, %s596
          %s600 = smul.addr %s599, 4
          %s601 = scalar_lea.vmem %s3, %s600
        $region48: #{tpu_custom_call.1} parent=43 // pred_fallthru
          _
      $region44: #{tpu_custom_call.1} parent=5 // pred_fallthru
        _
    $region6: #{tpu_custom_call.1} parent=1 // loop_footer
      %s16 = sadd.s32 1, %s12
    $region7: #{tpu_custom_call.1} parent=1 // loop_footer_branch
      %11 = sbr.rel target = $region3
    $region8: #{tpu_custom_call.1} parent=1 // loop_exit
      _
    %602 = vsyncpa [#allocation3], 1
    %s603 = scalar_lea.sflag [#allocation3], 1
    %604 = vsyncpa %s603, 1

</llo_original>
